<compile_context>
chip_gen: v7x
topology: tpu7x:2x2x1
jax: 0.10.0
libtpu: 0.0.40
codegen_flags: <defaults>
</compile_context>

<pallas_src>
import functools

import jax
import jax.numpy as jnp
from jax.experimental import pallas as pl
from jax.experimental.pallas import tpu as pltpu


def _ce_partial_kernel(cols_ref, logits_ref, labels_ref, out_ref, *,
                       n_total, tile_rows, mask_tail):
    """Partial (per-tile) sum of softmax cross-entropy NLL.

    cols_ref:   (1, C)  int32 column indices (resident block, same every step)
    logits_ref: (TN, C) logits tile in its native dtype (f32 or bf16)
    labels_ref: (TN, 1) int32 labels tile
    out_ref:    (1, 1)  f32 SMEM partial-sum block for this tile
    """
    i = pl.program_id(0)

    x = logits_ref[...]                                   # (TN, C) native dtype
    labels = labels_ref[...]                              # (TN, 1) int32
    cols = cols_ref[...]                                  # (1, C)  int32

    # Target-class logit picked straight from the raw native-dtype tile:
    # exactly one non-zero per row, so the reduce is exact even in bf16.
    picked = jnp.sum(
        jnp.where(cols == labels, x, jnp.zeros((), x.dtype)),
        axis=-1, keepdims=True).astype(jnp.float32)        # (TN, 1)

    # Row max in native dtype (exact); f32 only for exp + accumulation.
    m = jnp.max(x, axis=-1, keepdims=True).astype(jnp.float32)       # (TN, 1)
    lse = jnp.log(jnp.sum(jnp.exp(x.astype(jnp.float32) - m),
                          axis=-1, keepdims=True))                   # (TN, 1)

    per_sample = (m + lse) - picked                        # (TN, 1) per-row NLL

    if mask_tail:
        last = pl.num_programs(0) - 1

        @pl.when(i == last)
        def _():
            row_ids = i * tile_rows + jax.lax.broadcasted_iota(
                jnp.int32, per_sample.shape, 0)
            out_ref[0, 0] = jnp.sum(
                jnp.where(row_ids < n_total, per_sample, jnp.float32(0.0)))

        @pl.when(i != last)
        def _():
            out_ref[0, 0] = jnp.sum(per_sample)
    else:
        out_ref[0, 0] = jnp.sum(per_sample)


def _vmem_limit_bytes() -> int:
    """Generation-aware scoped-VMEM request (<= half the physical capacity)."""
    try:
        cap = int(pltpu.get_tpu_info().vmem_capacity_bytes)
    except Exception:
        cap = 64 * 1024 * 1024          # assume the smallest (v7x) if unknown
    return int(min(cap // 2, 64 * 1024 * 1024))


def _default_tile_rows(n: int, c: int, itemsize: int, vmem_limit: int) -> int:
    """Pick TN from the in-kernel working set, not just native input bytes.

    Per logits row the kernel holds roughly:
      2 * C * itemsize   double-buffered native-dtype input tile
    + 3 * C * 4          live f32 temporaries (upcast / shifted / exp)
    and we budget half the scoped-VMEM limit for it.
    """
    per_row = 2 * c * itemsize + 3 * c * 4
    tr = (vmem_limit // 2) // max(1, per_row)
    tr = min(tr, 4096)                  # big tiles amortize per-step overhead
    if tr >= n:
        return int(n)                   # single tile, no tail padding
    mult = 16 if itemsize < 4 else 8    # keep bf16 tiles on packed (16, 128)
    tr = max(mult, tr - (tr % mult))
    return int(tr)


def cross_entropy_loss(logits: jax.Array, labels: jax.Array, *,
                       tile_rows=None) -> jax.Array:
    """Pallas equivalent of F.cross_entropy(logits, labels) (mean reduction).

    logits: (N, C) float32 / bfloat16 (shipped over HBM in native dtype —
            prefer bf16 at the call site on bandwidth-bound parts like v5e)
    labels: (N,)   integer class indices
    returns scalar float32
    """
    n, c = logits.shape
    labels_2d = labels.astype(jnp.int32).reshape(n, 1)
    cols = jnp.arange(c, dtype=jnp.int32).reshape(1, c)
    itemsize = jnp.dtype(logits.dtype).itemsize

    vmem_limit = _vmem_limit_bytes()
    if tile_rows is None:
        tile_rows = _default_tile_rows(n, c, itemsize, vmem_limit)
    tile_rows = int(min(int(tile_rows), n))

    num_tiles = -(-n // tile_rows)
    mask_tail = (n % tile_rows) != 0

    kernel = functools.partial(_ce_partial_kernel, n_total=n,
                               tile_rows=tile_rows, mask_tail=mask_tail)

    cost = pl.CostEstimate(
        flops=5 * n * c,
        transcendentals=n * c,
        bytes_accessed=n * c * itemsize + n * 4 + c * 4 + num_tiles * 4,
    )

    partials = pl.pallas_call(
        kernel,
        out_shape=jax.ShapeDtypeStruct((num_tiles, 1), jnp.float32),
        grid_spec=pltpu.PrefetchScalarGridSpec(
            num_scalar_prefetch=0,
            grid=(num_tiles,),
            in_specs=[
                pl.BlockSpec((1, c), lambda i: (0, 0)),           # resident cols
                pl.BlockSpec((tile_rows, c), lambda i: (i, 0)),   # logits tile
                pl.BlockSpec((tile_rows, 1), lambda i: (i, 0)),   # labels tile
            ],
            out_specs=pl.BlockSpec(
                (1, 1), lambda i: (i, 0), memory_space=pltpu.SMEM),
        ),
        compiler_params=pltpu.CompilerParams(
            dimension_semantics=("parallel",),   # independent tiles -> multi-TC
            vmem_limit_bytes=vmem_limit,
        ),
        cost_estimate=cost,
    )(cols, logits, labels_2d)

    # tiny finalize in the wrapper: sum per-tile partials, divide by true N
    return jnp.sum(partials) / jnp.float32(n)


if __name__ == "__main__":
    key = jax.random.PRNGKey(0)
    k1, k2, k3, k4 = jax.random.split(key, 4)

    # --- shape implied by the module: (N, C) logits, (N,) class indices ---
    N, C = 8, 32
    logits = jax.random.normal(k1, (N, C), dtype=jnp.float32)
    labels = jax.random.randint(k2, (N,), 0, C, dtype=jnp.int32)

    loss = cross_entropy_loss(logits, labels)
    jax.block_until_ready(loss)

    logp = jax.nn.log_softmax(logits, axis=-1)
    ref = -jnp.mean(logp[jnp.arange(N), labels])
    assert jnp.allclose(loss, ref, atol=1e-5, rtol=1e-5), (loss, ref)

    # --- multi-tile + ragged tail + native bf16 over HBM + C not a multiple
    #     of 128 (exercises tail masking and lane-padded reductions) ---
    N2, C2 = 20, 100
    logits2 = jax.random.normal(k3, (N2, C2), dtype=jnp.bfloat16)
    labels2 = jax.random.randint(k4, (N2,), 0, C2, dtype=jnp.int32)

    loss2 = cross_entropy_loss(logits2, labels2, tile_rows=16)  # 2 tiles, last ragged
    jax.block_until_ready(loss2)

    logp2 = jax.nn.log_softmax(logits2.astype(jnp.float32), axis=-1)
    ref2 = -jnp.mean(logp2[jnp.arange(N2), labels2])
    assert jnp.allclose(loss2, ref2, atol=1e-4, rtol=1e-4), (loss2, ref2)

    print("KERNEL_OK")
</pallas_src>

<mosaic_0001>
module attributes {stable_mosaic.version = 11 : i64} {
  func.func @_ce_partial_kernel(%arg0: i32, %arg1: memref<1x32xi32, #tpu.memory_space<vmem>>, %arg2: memref<8x32xf32, #tpu.memory_space<vmem>>, %arg3: memref<8x1xi32, #tpu.memory_space<vmem>>, %arg4: memref<1x1xf32, #tpu.memory_space<smem>>) attributes {dimension_semantics = [#tpu.dimension_semantics<parallel>], iteration_bounds = array<i64: 1>, scalar_prefetch = 0 : i64, scratch_operands = 0 : i64, tpu.core_type = #tpu.core_type<tc>, window_params = [{pipeline_mode = #tpu.pipeline_mode<synchronous>, transform_indices = @transform_0, window_bounds = array<i64: 1, 32>}, {transform_indices = @transform_1, window_bounds = array<i64: 8, 32>}, {transform_indices = @transform_2, window_bounds = array<i64: 8, 1>}, {transform_indices = @transform_3, window_bounds = array<i64: 1, 1>}]} {
    %c0 = arith.constant 0 : index
    %c0_0 = arith.constant 0 : index
    %0 = vector.load %arg2[%c0, %c0_0] : memref<8x32xf32, #tpu.memory_space<vmem>>, vector<8x32xf32>
    %c0_1 = arith.constant 0 : index
    %c0_2 = arith.constant 0 : index
    %1 = vector.load %arg3[%c0_1, %c0_2] : memref<8x1xi32, #tpu.memory_space<vmem>>, vector<8x1xi32>
    %c0_3 = arith.constant 0 : index
    %c0_4 = arith.constant 0 : index
    %2 = vector.load %arg1[%c0_3, %c0_4] : memref<1x32xi32, #tpu.memory_space<vmem>>, vector<1x32xi32>
    %3 = vector.broadcast %2 : vector<1x32xi32> to vector<8x32xi32>
    %4 = vector.broadcast %1 : vector<8x1xi32> to vector<8x32xi32>
    %5 = arith.cmpi eq, %3, %4 : vector<8x32xi32>
    %cst = arith.constant 0.000000e+00 : f32
    %6 = vector.broadcast %cst : f32 to vector<8x32xf32>
    %7 = arith.select %5, %0, %6 : vector<8x32xi1>, vector<8x32xf32>
    %cst_5 = arith.constant dense<0.000000e+00> : vector<8xf32>
    %8 = vector.multi_reduction <add>, %7, %cst_5 [1] : vector<8x32xf32> to vector<8xf32>
    %9 = vector.shape_cast %8 : vector<8xf32> to vector<8x1xf32>
    %cst_6 = arith.constant dense<0xFF800000> : vector<8xf32>
    %10 = vector.multi_reduction <maximumf>, %0, %cst_6 [1] : vector<8x32xf32> to vector<8xf32>
    %11 = vector.shape_cast %10 : vector<8xf32> to vector<8x1xf32>
    %12 = vector.broadcast %11 : vector<8x1xf32> to vector<8x32xf32>
    %13 = arith.subf %0, %12 : vector<8x32xf32>
    %14 = math.exp %13 : vector<8x32xf32>
    %cst_7 = arith.constant dense<0.000000e+00> : vector<8xf32>
    %15 = vector.multi_reduction <add>, %14, %cst_7 [1] : vector<8x32xf32> to vector<8xf32>
    %16 = vector.shape_cast %15 : vector<8xf32> to vector<8x1xf32>
    %17 = math.log %16 : vector<8x1xf32>
    %18 = arith.addf %11, %17 : vector<8x1xf32>
    %19 = arith.subf %18, %9 : vector<8x1xf32>
    %20 = vector.shape_cast %19 : vector<8x1xf32> to vector<1x8x1xf32>
    %cst_8 = arith.constant dense<0.000000e+00> : vector<1xf32>
    %21 = vector.multi_reduction <add>, %20, %cst_8 [1, 2] : vector<1x8x1xf32> to vector<1xf32>
    %22 = vector.shape_cast %21 : vector<1xf32> to vector<1x1x1xf32>
    %23 = vector.extract %22[0, 0, 0] : f32 from vector<1x1x1xf32>
    %c0_9 = arith.constant 0 : index
    %c0_10 = arith.constant 0 : index
    %24 = memref.load %arg4[%c0_9, %c0_10] : memref<1x1xf32, #tpu.memory_space<smem>>
    memref.store %23, %arg4[%c0_9, %c0_10] : memref<1x1xf32, #tpu.memory_space<smem>>
    return
  }
  func.func @transform_0(%arg0: i32) -> (i32, i32) {
    %c0_i32 = arith.constant 0 : i32
    %c0_i32_0 = arith.constant 0 : i32
    %c0_i32_1 = arith.constant 0 : i32
    return %c0_i32, %c0_i32_0 : i32, i32
  }
  func.func @transform_1(%arg0: i32) -> (i32, i32) {
    %c0_i32 = arith.constant 0 : i32
    %c0_i32_0 = arith.constant 0 : i32
    return %arg0, %c0_i32 : i32, i32
  }
  func.func @transform_2(%arg0: i32) -> (i32, i32) {
    %c0_i32 = arith.constant 0 : i32
    %c0_i32_0 = arith.constant 0 : i32
    return %arg0, %c0_i32 : i32, i32
  }
  func.func @transform_3(%arg0: i32) -> (i32, i32) {
    %c0_i32 = arith.constant 0 : i32
    %c0_i32_0 = arith.constant 0 : i32
    return %arg0, %c0_i32 : i32, i32
  }
}

</mosaic_0001>

<llo_original>
// kernel: tpu_custom_call.1
$region0: #{tpu_custom_call.1}
  #allocation0 [shape = 'u32[]', space=smem, size = 0x4, offset = 0x4, fixed_abs, tag = 'smem constant byte address 0x4 - core index']
  #allocation1 [shape = 'u32[144,128]{1,0:T(1,128)}', space=vmem, size = 0x12000, scoped, tag = 'internal scratch']
  %s0 = inlined_call_operand.vmem [shape: s32[1,32], index: 0, kind: input, shape index: {}]
  %s1 = inlined_call_operand.vmem [shape: f32[8,32], index: 1, kind: input, shape index: {}]
  %s2 = inlined_call_operand.vmem [shape: s32[8,1], index: 2, kind: input, shape index: {}]
  %s3 = inlined_call_operand.hbm [shape: f32[1,1], index: 3, kind: output, shape index: {}]
  %s4 = sld [smem:[#allocation0]]
  $region22: #{tpu_custom_call.1} parent=0
    _
  %s6 = ssub.s32 1, %s4
  %s7 = scalar_select 0, %s6, %s4
  $region1: #{tpu_custom_call.1} parent=0
    #allocation2 [shape = 'u8[512]{0}', space=smem, size = 0x200, scoped, tag = 'output window, operand 0, single buffered']
    #allocation3 [shape = 's32[1]{0}', space=sflag, size = 0x4, scoped, tag = 'scoped memory for tpu_custom_call.1']
    %8 = vsyncpa [#allocation3], 0
    // Predicated region
    $region2: #{tpu_custom_call.1} parent=1 // pred_check
      _
    $region3: #{tpu_custom_call.1} parent=1 // pred_check_branch
      %10 = sbr.rel (0) target = $region5
    $region4: #{tpu_custom_call.1} parent=1 // pred_region
      _
    $region5: #{tpu_custom_call.1} parent=1 // pred_fallthru
      _
    // Predicated region
    $region6: #{tpu_custom_call.1} parent=1 // pred_check
      _
    $region7: #{tpu_custom_call.1} parent=1 // pred_check_branch
      %12 = sbr.rel (0) target = $region9
    $region8: #{tpu_custom_call.1} parent=1 // pred_region
      _
    $region9: #{tpu_custom_call.1} parent=1 // pred_fallthru
      _
    // Predicated region
    $region10: #{tpu_custom_call.1} parent=1 // pred_check
      _
    $region11: #{tpu_custom_call.1} parent=1 // pred_check_branch
      %14 = sbr.rel (0) target = $region13
    $region12: #{tpu_custom_call.1} parent=1 // pred_region
      _
    $region13: #{tpu_custom_call.1} parent=1 // pred_fallthru
      _
    %v15 = vld [vmem:[%s1] sm:$0xff]
    %v16 = vld [vmem:[%s2] sm:$0xff]
    %v17 = vld [vmem:[%s0] sm:$0x1]
    %v18 = vlaneseq
    %v19 = vshrl.u32 %v18, 7
    %v20 = vsub.s32 0, %v19
    %v21 = vrot.slane %v17, %v20
    %22 = vset.pattern.permute.xlu0 0
    %23 = vperm.xlu0 %22, %v16
    %v24 = vpop.permute.xlu0 %23
    %vm25 = vcmp.eq.s32.totalorder %v21, %v24
    %v26 = vsel %vm25, %v15, 0.0
    %vm27 = vcmask 261120
    %v28 = vsel %vm27, %v26, 0.0
    %29 = vadd.xlane.f32.xlu0 %v28
    %v30 = vpop.xlane.xlu0 %29
    %v31 = vsel %vm27, %v15, -inf
    %32 = vmax.xlane.f32.xlu0 %v31
    %v33 = vpop.xlane.xlu0 %32
    %v34 = vsub.f32 %v15, %v33
    %v35 = vmul.f32 %v34, 1.442695
    %v36 = vpow.pop %v35
    %v37 = vsel %vm27, %v36, 0.0
    %38 = vadd.xlane.f32.xlu0 %v37
    %v39 = vpop.xlane.xlu0 %38
    %v40 = vlog2.pop %v39
    %v41 = vmul.f32 %v40, 0.6931472
    %v42 = vadd.f32 %v33, %v41
    %v43 = vsub.f32 %v42, %v30
    %vm44 = vcmask 7168
    %v45 = vsel %vm44, %v43, 0.0
    %46 = vadd.xlane.f32.xlu0 %v45
    %v47 = vpop.xlane.xlu0 %46
    %v48 = vrot.slane %v47, 4
    %v49 = vadd.f32 %v47, %v48
    %v50 = vrot.slane %v49, 2
    %v51 = vadd.f32 %v49, %v50
    %v52 = vrot.slane %v51, 1
    %v53 = vadd.f32 %v51, %v52
    %s54 = vtos %v53
    %s55 = scalar_lea.smem [#allocation2], 0
    %56 = sst [smem:[%s55]] %s54
    // Predicated region
    $region14: #{tpu_custom_call.1} parent=1 // pred_check
      _
    $region15: #{tpu_custom_call.1} parent=1 // pred_check_branch
      %58 = sbr.rel (0) target = $region17
    $region16: #{tpu_custom_call.1} parent=1 // pred_region
      %s60 = ssub.s32 16, 16
      %61 = vsyncadd [#allocation3], %s60
      %64 = dma.smem_to_hbm [#allocation2], 16, %s3, [#allocation3]
    $region17: #{tpu_custom_call.1} parent=1 // pred_fallthru
      _
    // Predicated region
    $region18: #{tpu_custom_call.1} parent=1 // pred_check
      _
    $region19: #{tpu_custom_call.1} parent=1 // pred_check_branch
      %66 = sbr.rel (0) target = $region21
    $region20: #{tpu_custom_call.1} parent=1 // pred_region
      %67 = dma.done [#allocation3], 16
    $region21: #{tpu_custom_call.1} parent=1 // pred_fallthru
      _
    %68 = sfence
    %69 = vsyncpa [#allocation3], 1

</llo_original>
